<compile_context>
chip_gen: v6e
topology: v6e:2x2x1
jax: 0.10.0
libtpu: 0.0.40
codegen_flags: <defaults>
</compile_context>

<pallas_src>
import jax
import jax.numpy as jnp
from jax.experimental import pallas as pl
from jax.experimental.pallas import tpu as pltpu

EPS = 1e-5
IN_FEATURES = 5
OUT_FEATURES = 2


def _round_up(n, m):
    return ((n + m - 1) // m) * m


def _mlp_kernel(x_ref, w_ref, v_ref, o_ref):
    """x_ref: [B, F] (zero-padded), w_ref: [4, F, F], v_ref: [8, F], o_ref: [B, F]."""
    h = x_ref[...]
    v = v_ref[...]  # single small load: g1, be1, g2, be2, g3, be3, b4, pad

    # Three (Linear -> BatchNorm(train) -> ReLU) blocks.  Linear biases are
    # omitted: the batch-mean subtraction cancels them exactly.
    for layer in range(3):
        h = jnp.dot(h, w_ref[layer], preferred_element_type=jnp.float32)
        gamma = v[2 * layer:2 * layer + 1, :]      # [1, F]
        beta = v[2 * layer + 1:2 * layer + 2, :]   # [1, F]
        mean = jnp.mean(h, axis=0, keepdims=True)
        hc = h - mean
        var = jnp.mean(hc * hc, axis=0, keepdims=True)
        scale = gamma * jax.lax.rsqrt(var + EPS)   # gamma folded into scale
        h = jnp.maximum(hc * scale + beta, 0.0)

    # Final Linear keeps its bias (row 6 of the packed vector array).
    h = jnp.dot(h, w_ref[3], preferred_element_type=jnp.float32) + v[6:7, :]
    o_ref[...] = h.astype(o_ref.dtype)


@jax.jit
def mlp_forward(x, w_packed, vec_packed):
    """x: [B, 5] f32 -> [B, 2] f32."""
    B = x.shape[0]
    F = w_packed.shape[-1]
    x_pad = jnp.pad(x, ((0, 0), (0, F - x.shape[1])))

    vmem = pl.BlockSpec(memory_space=pltpu.MemorySpace.VMEM)
    out_pad = pl.pallas_call(
        _mlp_kernel,
        out_shape=jax.ShapeDtypeStruct((B, F), jnp.float32),
        in_specs=[vmem, vmem, vmem],
        out_specs=vmem,
    )(x_pad, w_packed, vec_packed)
    # Lane-dense [B, F] slab inside the kernel; real 2-wide result sliced here.
    return out_pad[:, :OUT_FEATURES]


def init_params(key, neurons):
    """Deterministic init mimicking nn.Linear (uniform +-1/sqrt(fan_in)) and
    BatchNorm1d (gamma=1, beta=0).  Weights stored as [in, out]."""
    dims = [IN_FEATURES, neurons[0], neurons[1], neurons[2], OUT_FEATURES]
    params = []
    keys = jax.random.split(key, 8)
    ki = 0
    for layer in range(4):
        fan_in, fan_out = dims[layer], dims[layer + 1]
        bound = 1.0 / (fan_in ** 0.5)
        w = jax.random.uniform(keys[ki], (fan_in, fan_out),
                               minval=-bound, maxval=bound, dtype=jnp.float32)
        ki += 1
        b = jax.random.uniform(keys[ki], (1, fan_out),
                               minval=-bound, maxval=bound, dtype=jnp.float32)
        ki += 1
        params.append(w)
        params.append(b)
        if layer < 3:  # BatchNorm after the first three linears
            params.append(jnp.ones((1, fan_out), jnp.float32))   # gamma
            params.append(jnp.zeros((1, fan_out), jnp.float32))  # beta
    return tuple(params)


def pack_params(params, neurons):
    """Pack 4 weights into [4, F, F] and the 7 needed vectors into [8, F].
    b1/b2/b3 are intentionally NOT packed (cancelled by BatchNorm)."""
    (w1, b1, g1, be1, w2, b2, g2, be2, w3, b3, g3, be3, w4, b4) = params
    dims = [IN_FEATURES, neurons[0], neurons[1], neurons[2], OUT_FEATURES]
    F = _round_up(max(dims), 128)

    w_packed = jnp.zeros((4, F, F), jnp.float32)
    for l, w in enumerate((w1, w2, w3, w4)):
        w_packed = w_packed.at[l, :dims[l], :dims[l + 1]].set(w)

    rows = (g1, be1, g2, be2, g3, be3, b4)
    vec_packed = jnp.zeros((8, F), jnp.float32)
    for r, vec in enumerate(rows):
        flat = vec.reshape(-1)
        vec_packed = vec_packed.at[r, :flat.shape[0]].set(flat)
    return w_packed, vec_packed


def _bn_relu_ref(h, gamma, beta):
    mean = jnp.mean(h, axis=0, keepdims=True)
    var = jnp.mean((h - mean) ** 2, axis=0, keepdims=True)
    return jnp.maximum((h - mean) / jnp.sqrt(var + EPS) * gamma + beta, 0.0)


def reference_forward(x, params):
    """Pure-JAX reference with the FULL original math (including b1..b3)."""
    (w1, b1, g1, be1, w2, b2, g2, be2, w3, b3, g3, be3, w4, b4) = params
    h = _bn_relu_ref(x @ w1 + b1, g1, be1)
    h = _bn_relu_ref(h @ w2 + b2, g2, be2)
    h = _bn_relu_ref(h @ w3 + b3, g3, be3)
    return h @ w4 + b4


if __name__ == "__main__":
    neurons = (32, 64, 32)
    batch = 8

    key = jax.random.PRNGKey(0)
    kx, kp = jax.random.split(key)
    x = jax.random.normal(kx, (batch, IN_FEATURES), dtype=jnp.float32)
    params = init_params(kp, neurons)
    w_packed, vec_packed = pack_params(params, neurons)

    out = mlp_forward(x, w_packed, vec_packed)
    out = jax.block_until_ready(out)

    ref = reference_forward(x, params)
    assert out.shape == (batch, OUT_FEATURES)
    assert jnp.allclose(out, ref, atol=1e-4, rtol=1e-4), \
        float(jnp.max(jnp.abs(out - ref)))

    print("KERNEL_OK")
</pallas_src>

<mosaic_0001>
module attributes {stable_mosaic.version = 11 : i64} {
  func.func @_mlp_kernel(%arg0: memref<8x128xf32, #tpu.memory_space<vmem>>, %arg1: memref<4x128x128xf32, #tpu.memory_space<vmem>>, %arg2: memref<8x128xf32, #tpu.memory_space<vmem>>, %arg3: memref<8x128xf32, #tpu.memory_space<vmem>>) attributes {dimension_semantics = [], scalar_prefetch = 0 : i64, scratch_operands = 0 : i64, tpu.core_type = #tpu.core_type<tc>} {
    %c0 = arith.constant 0 : index
    %c0_0 = arith.constant 0 : index
    %0 = vector.load %arg0[%c0, %c0_0] : memref<8x128xf32, #tpu.memory_space<vmem>>, vector<8x128xf32>
    %c0_1 = arith.constant 0 : index
    %c0_2 = arith.constant 0 : index
    %1 = vector.load %arg2[%c0_1, %c0_2] : memref<8x128xf32, #tpu.memory_space<vmem>>, vector<8x128xf32>
    %c0_3 = arith.constant 0 : index
    %c0_4 = arith.constant 0 : index
    %c0_5 = arith.constant 0 : index
    %2 = vector.load %arg1[%c0_3, %c0_4, %c0_5] : memref<4x128x128xf32, #tpu.memory_space<vmem>>, vector<1x128x128xf32>
    %3 = vector.shape_cast %2 : vector<1x128x128xf32> to vector<128x128xf32>
    %cst = arith.constant dense<0.000000e+00> : vector<8x128xf32>
    %4 = tpu.matmul %0, %3, %cst {dimension_numbers = #tpu.dot_dimension_numbers<[1], [0], [0], [1], [0, 0, 1, 1], [], []>} : vector<8x128xf32>, vector<128x128xf32>, vector<8x128xf32> -> vector<8x128xf32>
    %5 = vector.extract_strided_slice %1 {offsets = [0, 0], sizes = [1, 128], strides = [1, 1]} : vector<8x128xf32> to vector<1x128xf32>
    %6 = vector.extract_strided_slice %1 {offsets = [1, 0], sizes = [1, 128], strides = [1, 1]} : vector<8x128xf32> to vector<1x128xf32>
    %cst_6 = arith.constant dense<0.000000e+00> : vector<128xf32>
    %7 = vector.multi_reduction <add>, %4, %cst_6 [0] : vector<8x128xf32> to vector<128xf32>
    %8 = vector.shape_cast %7 : vector<128xf32> to vector<1x128xf32>
    %cst_7 = arith.constant 8.000000e+00 : f32
    %9 = vector.broadcast %cst_7 : f32 to vector<1x128xf32>
    %10 = arith.divf %8, %9 : vector<1x128xf32>
    %11 = vector.broadcast %10 : vector<1x128xf32> to vector<8x128xf32>
    %12 = arith.subf %4, %11 : vector<8x128xf32>
    %13 = arith.mulf %12, %12 : vector<8x128xf32>
    %cst_8 = arith.constant dense<0.000000e+00> : vector<128xf32>
    %14 = vector.multi_reduction <add>, %13, %cst_8 [0] : vector<8x128xf32> to vector<128xf32>
    %15 = vector.shape_cast %14 : vector<128xf32> to vector<1x128xf32>
    %cst_9 = arith.constant 8.000000e+00 : f32
    %16 = vector.broadcast %cst_9 : f32 to vector<1x128xf32>
    %17 = arith.divf %15, %16 : vector<1x128xf32>
    %cst_10 = arith.constant 9.99999974E-6 : f32
    %18 = vector.broadcast %cst_10 : f32 to vector<1x128xf32>
    %19 = arith.addf %17, %18 : vector<1x128xf32>
    %20 = math.rsqrt %19 : vector<1x128xf32>
    %21 = arith.mulf %5, %20 : vector<1x128xf32>
    %22 = vector.broadcast %21 : vector<1x128xf32> to vector<8x128xf32>
    %23 = arith.mulf %12, %22 : vector<8x128xf32>
    %24 = vector.broadcast %6 : vector<1x128xf32> to vector<8x128xf32>
    %25 = arith.addf %23, %24 : vector<8x128xf32>
    %cst_11 = arith.constant 0.000000e+00 : f32
    %26 = vector.broadcast %cst_11 : f32 to vector<8x128xf32>
    %27 = arith.maximumf %25, %26 : vector<8x128xf32>
    %c1 = arith.constant 1 : index
    %c0_12 = arith.constant 0 : index
    %c0_13 = arith.constant 0 : index
    %28 = vector.load %arg1[%c1, %c0_12, %c0_13] : memref<4x128x128xf32, #tpu.memory_space<vmem>>, vector<1x128x128xf32>
    %29 = vector.shape_cast %28 : vector<1x128x128xf32> to vector<128x128xf32>
    %cst_14 = arith.constant dense<0.000000e+00> : vector<8x128xf32>
    %30 = tpu.matmul %27, %29, %cst_14 {dimension_numbers = #tpu.dot_dimension_numbers<[1], [0], [0], [1], [0, 0, 1, 1], [], []>} : vector<8x128xf32>, vector<128x128xf32>, vector<8x128xf32> -> vector<8x128xf32>
    %31 = vector.extract_strided_slice %1 {offsets = [2, 0], sizes = [1, 128], strides = [1, 1]} : vector<8x128xf32> to vector<1x128xf32>
    %32 = vector.extract_strided_slice %1 {offsets = [3, 0], sizes = [1, 128], strides = [1, 1]} : vector<8x128xf32> to vector<1x128xf32>
    %cst_15 = arith.constant dense<0.000000e+00> : vector<128xf32>
    %33 = vector.multi_reduction <add>, %30, %cst_15 [0] : vector<8x128xf32> to vector<128xf32>
    %34 = vector.shape_cast %33 : vector<128xf32> to vector<1x128xf32>
    %cst_16 = arith.constant 8.000000e+00 : f32
    %35 = vector.broadcast %cst_16 : f32 to vector<1x128xf32>
    %36 = arith.divf %34, %35 : vector<1x128xf32>
    %37 = vector.broadcast %36 : vector<1x128xf32> to vector<8x128xf32>
    %38 = arith.subf %30, %37 : vector<8x128xf32>
    %39 = arith.mulf %38, %38 : vector<8x128xf32>
    %cst_17 = arith.constant dense<0.000000e+00> : vector<128xf32>
    %40 = vector.multi_reduction <add>, %39, %cst_17 [0] : vector<8x128xf32> to vector<128xf32>
    %41 = vector.shape_cast %40 : vector<128xf32> to vector<1x128xf32>
    %cst_18 = arith.constant 8.000000e+00 : f32
    %42 = vector.broadcast %cst_18 : f32 to vector<1x128xf32>
    %43 = arith.divf %41, %42 : vector<1x128xf32>
    %cst_19 = arith.constant 9.99999974E-6 : f32
    %44 = vector.broadcast %cst_19 : f32 to vector<1x128xf32>
    %45 = arith.addf %43, %44 : vector<1x128xf32>
    %46 = math.rsqrt %45 : vector<1x128xf32>
    %47 = arith.mulf %31, %46 : vector<1x128xf32>
    %48 = vector.broadcast %47 : vector<1x128xf32> to vector<8x128xf32>
    %49 = arith.mulf %38, %48 : vector<8x128xf32>
    %50 = vector.broadcast %32 : vector<1x128xf32> to vector<8x128xf32>
    %51 = arith.addf %49, %50 : vector<8x128xf32>
    %cst_20 = arith.constant 0.000000e+00 : f32
    %52 = vector.broadcast %cst_20 : f32 to vector<8x128xf32>
    %53 = arith.maximumf %51, %52 : vector<8x128xf32>
    %c2 = arith.constant 2 : index
    %c0_21 = arith.constant 0 : index
    %c0_22 = arith.constant 0 : index
    %54 = vector.load %arg1[%c2, %c0_21, %c0_22] : memref<4x128x128xf32, #tpu.memory_space<vmem>>, vector<1x128x128xf32>
    %55 = vector.shape_cast %54 : vector<1x128x128xf32> to vector<128x128xf32>
    %cst_23 = arith.constant dense<0.000000e+00> : vector<8x128xf32>
    %56 = tpu.matmul %53, %55, %cst_23 {dimension_numbers = #tpu.dot_dimension_numbers<[1], [0], [0], [1], [0, 0, 1, 1], [], []>} : vector<8x128xf32>, vector<128x128xf32>, vector<8x128xf32> -> vector<8x128xf32>
    %57 = vector.extract_strided_slice %1 {offsets = [4, 0], sizes = [1, 128], strides = [1, 1]} : vector<8x128xf32> to vector<1x128xf32>
    %58 = vector.extract_strided_slice %1 {offsets = [5, 0], sizes = [1, 128], strides = [1, 1]} : vector<8x128xf32> to vector<1x128xf32>
    %cst_24 = arith.constant dense<0.000000e+00> : vector<128xf32>
    %59 = vector.multi_reduction <add>, %56, %cst_24 [0] : vector<8x128xf32> to vector<128xf32>
    %60 = vector.shape_cast %59 : vector<128xf32> to vector<1x128xf32>
    %cst_25 = arith.constant 8.000000e+00 : f32
    %61 = vector.broadcast %cst_25 : f32 to vector<1x128xf32>
    %62 = arith.divf %60, %61 : vector<1x128xf32>
    %63 = vector.broadcast %62 : vector<1x128xf32> to vector<8x128xf32>
    %64 = arith.subf %56, %63 : vector<8x128xf32>
    %65 = arith.mulf %64, %64 : vector<8x128xf32>
    %cst_26 = arith.constant dense<0.000000e+00> : vector<128xf32>
    %66 = vector.multi_reduction <add>, %65, %cst_26 [0] : vector<8x128xf32> to vector<128xf32>
    %67 = vector.shape_cast %66 : vector<128xf32> to vector<1x128xf32>
    %cst_27 = arith.constant 8.000000e+00 : f32
    %68 = vector.broadcast %cst_27 : f32 to vector<1x128xf32>
    %69 = arith.divf %67, %68 : vector<1x128xf32>
    %cst_28 = arith.constant 9.99999974E-6 : f32
    %70 = vector.broadcast %cst_28 : f32 to vector<1x128xf32>
    %71 = arith.addf %69, %70 : vector<1x128xf32>
    %72 = math.rsqrt %71 : vector<1x128xf32>
    %73 = arith.mulf %57, %72 : vector<1x128xf32>
    %74 = vector.broadcast %73 : vector<1x128xf32> to vector<8x128xf32>
    %75 = arith.mulf %64, %74 : vector<8x128xf32>
    %76 = vector.broadcast %58 : vector<1x128xf32> to vector<8x128xf32>
    %77 = arith.addf %75, %76 : vector<8x128xf32>
    %cst_29 = arith.constant 0.000000e+00 : f32
    %78 = vector.broadcast %cst_29 : f32 to vector<8x128xf32>
    %79 = arith.maximumf %77, %78 : vector<8x128xf32>
    %c3 = arith.constant 3 : index
    %c0_30 = arith.constant 0 : index
    %c0_31 = arith.constant 0 : index
    %80 = vector.load %arg1[%c3, %c0_30, %c0_31] : memref<4x128x128xf32, #tpu.memory_space<vmem>>, vector<1x128x128xf32>
    %81 = vector.shape_cast %80 : vector<1x128x128xf32> to vector<128x128xf32>
    %cst_32 = arith.constant dense<0.000000e+00> : vector<8x128xf32>
    %82 = tpu.matmul %79, %81, %cst_32 {dimension_numbers = #tpu.dot_dimension_numbers<[1], [0], [0], [1], [0, 0, 1, 1], [], []>} : vector<8x128xf32>, vector<128x128xf32>, vector<8x128xf32> -> vector<8x128xf32>
    %83 = vector.extract_strided_slice %1 {offsets = [6, 0], sizes = [1, 128], strides = [1, 1]} : vector<8x128xf32> to vector<1x128xf32>
    %84 = vector.broadcast %83 : vector<1x128xf32> to vector<8x128xf32>
    %85 = arith.addf %82, %84 : vector<8x128xf32>
    %c0_33 = arith.constant 0 : index
    %c0_34 = arith.constant 0 : index
    %86 = vector.load %arg3[%c0_33, %c0_34] : memref<8x128xf32, #tpu.memory_space<vmem>>, vector<8x128xf32>
    tpu.vector_store %arg3[%c0_33, %c0_34], %85 {strides = array<i32>} : memref<8x128xf32, #tpu.memory_space<vmem>>, vector<8x128xf32>,
    return
  }
}

</mosaic_0001>

<llo_original>
// kernel: mlp_forward.1
$region0: #{mlp_forward.1}
  #allocation0 [shape = 'u32[]', space=smem, size = 0x4, offset = 0x4, fixed_abs, tag = 'smem constant byte address 0x4 - core index']
  #allocation1 [shape = 'u32[144,128]{1,0:T(1,128)}', space=vmem, size = 0x12000, scoped, tag = 'internal scratch']
  %s0 = inlined_call_operand.vmem [shape: f32[8,128], index: 0, kind: input, shape index: {}]
  %s1 = inlined_call_operand.hbm [shape: f32[4,128,128], index: 1, kind: input, shape index: {}]
  %s2 = inlined_call_operand.vmem [shape: f32[8,128], index: 2, kind: input, shape index: {}]
  %s3 = inlined_call_operand.vmem [shape: f32[8,128], index: 3, kind: output, shape index: {}]
  %s4 = sld [smem:[#allocation0]]
  $region26: #{mlp_forward.1} parent=0
    _
  %s6 = ssub.s32 1, %s4
  %s7 = scalar_select 0, %s6, %s4
  $region1: #{mlp_forward.1} parent=0
    #allocation2 [shape = 'u8[262144]{0}', space=vmem, size = 0x40000, scoped, tag = 'input window, operand 1, single buffered']
    #allocation3 [shape = 's32[1]{0}', space=sflag, size = 0x4, scoped, tag = 'scoped memory for mlp_forward.1']
    %8 = vsyncpa [#allocation3], 0
    // Predicated region
    $region2: #{mlp_forward.1} parent=1 // pred_check
      _
    $region3: #{mlp_forward.1} parent=1 // pred_check_branch
      %10 = sbr.rel (0) target = $region5
    $region4: #{mlp_forward.1} parent=1 // pred_region
      _
    $region5: #{mlp_forward.1} parent=1 // pred_fallthru
      _
    // Predicated region
    $region6: #{mlp_forward.1} parent=1 // pred_check
      _
    $region7: #{mlp_forward.1} parent=1 // pred_check_branch
      %12 = sbr.rel (0) target = $region9
    $region8: #{mlp_forward.1} parent=1 // pred_region
      %s14 = ssub.s32 8192, 8192
      %15 = vsyncadd [#allocation3], %s14
      %s16 = sshll.u32 [#allocation2], 4
      %s17 = int_to_ptr.vmem [resolvable:$true] %s16
      %22 = dma.hbm_to_vmem [thread:$0]  %s1, 8192, %s17, [#allocation3], 128, 128, 8
    $region9: #{mlp_forward.1} parent=1 // pred_fallthru
      _
    // Predicated region
    $region10: #{mlp_forward.1} parent=1 // pred_check
      _
    $region11: #{mlp_forward.1} parent=1 // pred_check_branch
      %24 = sbr.rel (0) target = $region13
    $region12: #{mlp_forward.1} parent=1 // pred_region
      _
    $region13: #{mlp_forward.1} parent=1 // pred_fallthru
      _
    // Predicated region
    $region14: #{mlp_forward.1} parent=1 // pred_check
      _
    $region15: #{mlp_forward.1} parent=1 // pred_check_branch
      %26 = sbr.rel (0) target = $region17
    $region16: #{mlp_forward.1} parent=1 // pred_region
      %27 = dma.done [#allocation3], 8192
    $region17: #{mlp_forward.1} parent=1 // pred_fallthru
      _
    %v28 = vld [vmem:[%s0] sm:$0xff]
    %v29 = vld [vmem:[%s2] sm:$0xff]
    %v30 = vld [vmem:[#allocation2] sm:$0xff]
    %v31 = vld [vmem:[#allocation2 + $0x8] sm:$0xff]
    %v32 = vld [vmem:[#allocation2 + $0x10] sm:$0xff]
    %v33 = vld [vmem:[#allocation2 + $0x18] sm:$0xff]
    %v34 = vld [vmem:[#allocation2 + $0x20] sm:$0xff]
    %v35 = vld [vmem:[#allocation2 + $0x28] sm:$0xff]
    %v36 = vld [vmem:[#allocation2 + $0x30] sm:$0xff]
    %v37 = vld [vmem:[#allocation2 + $0x38] sm:$0xff]
    %v38 = vld [vmem:[#allocation2 + $0x40] sm:$0xff]
    %v39 = vld [vmem:[#allocation2 + $0x48] sm:$0xff]
    %v40 = vld [vmem:[#allocation2 + $0x50] sm:$0xff]
    %v41 = vld [vmem:[#allocation2 + $0x58] sm:$0xff]
    %v42 = vld [vmem:[#allocation2 + $0x60] sm:$0xff]
    %v43 = vld [vmem:[#allocation2 + $0x68] sm:$0xff]
    %v44 = vld [vmem:[#allocation2 + $0x70] sm:$0xff]
    %v45 = vld [vmem:[#allocation2 + $0x78] sm:$0xff]
    %46 = vmatprep.subr.mxu0 0.0
    %47 = vmatpush1.msra.mxu0 %v45
    %48 = vmatprep.subr.mxu0 0.0
    %49 = vmatpush1.msra.mxu0 %v44
    %50 = vmatprep.subr.mxu0 0.0
    %51 = vmatpush1.msra.mxu0 %v43
    %52 = vmatprep.subr.mxu0 0.0
    %53 = vmatpush1.msra.mxu0 %v42
    %54 = vmatprep.subr.mxu0 0.0
    %55 = vmatpush1.msra.mxu0 %v41
    %56 = vmatprep.subr.mxu0 0.0
    %57 = vmatpush1.msra.mxu0 %v40
    %58 = vmatprep.subr.mxu0 0.0
    %59 = vmatpush1.msra.mxu0 %v39
    %60 = vmatprep.subr.mxu0 0.0
    %61 = vmatpush1.msra.mxu0 %v38
    %62 = vmatprep.subr.mxu0 0.0
    %63 = vmatpush1.msra.mxu0 %v37
    %64 = vmatprep.subr.mxu0 0.0
    %65 = vmatpush1.msra.mxu0 %v36
    %66 = vmatprep.subr.mxu0 0.0
    %67 = vmatpush1.msra.mxu0 %v35
    %68 = vmatprep.subr.mxu0 0.0
    %69 = vmatpush1.msra.mxu0 %v34
    %70 = vmatprep.subr.mxu0 0.0
    %71 = vmatpush1.msra.mxu0 %v33
    %72 = vmatprep.subr.mxu0 0.0
    %73 = vmatpush1.msra.mxu0 %v32
    %74 = vmatprep.subr.mxu0 0.0
    %75 = vmatpush1.msra.mxu0 %v31
    %76 = vmatprep.subr.mxu0 0.0
    %77 = vmatpush1.msra.mxu0 %v30
    %78 = vmatprep.subr.mxu0 0.0
    %79 = vmatpush2.msra.mxu0 0.0
    %80 = vmatprep.subr.mxu0 0.0
    %81 = vmatpush2.msra.mxu0 0.0
    %82 = vmatprep.subr.mxu0 0.0
    %83 = vmatpush2.msra.mxu0 0.0
    %84 = vmatprep.subr.mxu0 0.0
    %85 = vmatpush2.msra.mxu0 0.0
    %86 = vmatprep.subr.mxu0 0.0
    %87 = vmatpush2.msra.mxu0 0.0
    %88 = vmatprep.subr.mxu0 0.0
    %89 = vmatpush2.msra.mxu0 0.0
    %90 = vmatprep.subr.mxu0 0.0
    %91 = vmatpush2.msra.mxu0 0.0
    %92 = vmatprep.subr.mxu0 0.0
    %93 = vmatpush2.msra.mxu0 0.0
    %94 = vmatprep.subr.mxu0 0.0
    %95 = vmatpush2.msra.mxu0 0.0
    %96 = vmatprep.subr.mxu0 0.0
    %97 = vmatpush2.msra.mxu0 0.0
    %98 = vmatprep.subr.mxu0 0.0
    %99 = vmatpush2.msra.mxu0 0.0
    %100 = vmatprep.subr.mxu0 0.0
    %101 = vmatpush2.msra.mxu0 0.0
    %102 = vmatprep.subr.mxu0 0.0
    %103 = vmatpush2.msra.mxu0 0.0
    %104 = vmatprep.subr.mxu0 0.0
    %105 = vmatpush2.msra.mxu0 0.0
    %106 = vmatprep.subr.mxu0 0.0
    %107 = vmatpush2.msra.mxu0 0.0
    %108 = vmatprep.subr.mxu0 0.0
    %109 = vmatpush2.msra.mxu0 0.0
    %110 = vmatprep.mubr.f32.mxu0 0.0
    %111 = vmatmul.mubr.f32.gmra.mxu0 %v28
    %v112 = vpop.f32.mrf.mxu0
    %v113 = vadd.f32 0.0, %v112
    %v114 = vpop.f32.mrf.mxu0
    %115 = vdwg.mxu0
    %v116 = vrot.slane %v113, 4
    %v117 = vadd.f32 %v113, %v116
    %v118 = vrot.slane %v117, 2
    %v119 = vadd.f32 %v117, %v118
    %v120 = vrot.slane %v119, 1
    %v121 = vadd.f32 %v119, %v120
    %v122 = vrcp.pop 8.0
    %v123 = vmul.f32 %v121, %v122
    %v124 = vsub.f32 %v113, %v123
    %v125 = vmul.f32 %v124, %v124
    %v126 = vrot.slane %v125, 4
    %v127 = vadd.f32 %v125, %v126
    %v128 = vrot.slane %v127, 2
    %v129 = vadd.f32 %v127, %v128
    %v130 = vrot.slane %v129, 1
    %v131 = vadd.f32 %v129, %v130
    %v132 = vmul.f32 %v131, %v122
    %v133 = vadd.f32 %v132, 1e-05
    %v134 = vrsqrt.pop %v133
    %v135 = vmul.f32 %v29, %v134
    %v136 = vlaneseq
    %v137 = vshrl.u32 %v136, 7
    %v138 = vsub.s32 0, %v137
    %v139 = vrot.slane %v135, %v138
    %v140 = vmul.f32 %v124, %v139
    %v141 = vlaneseq
    %v142 = vshrl.u32 %v141, 7
    %v143 = vsub.s32 1, %v142
    %v144 = vrot.slane %v29, %v143
    %v145 = vadd.f32 %v140, %v144
    %v146 = vmax.f32 %v145, 0.0
    %s147 = scalar_lea.vmem [#allocation2], 128
    %v148 = vld [vmem:[%s147] sm:$0xff]
    %v149 = vld [vmem:[%s147 + $0x8] sm:$0xff]
    %v150 = vld [vmem:[%s147 + $0x10] sm:$0xff]
    %v151 = vld [vmem:[%s147 + $0x18] sm:$0xff]
    %v152 = vld [vmem:[%s147 + $0x20] sm:$0xff]
    %v153 = vld [vmem:[%s147 + $0x28] sm:$0xff]
    %v154 = vld [vmem:[%s147 + $0x30] sm:$0xff]
    %v155 = vld [vmem:[%s147 + $0x38] sm:$0xff]
    %v156 = vld [vmem:[%s147 + $0x40] sm:$0xff]
    %v157 = vld [vmem:[%s147 + $0x48] sm:$0xff]
    %v158 = vld [vmem:[%s147 + $0x50] sm:$0xff]
    %v159 = vld [vmem:[%s147 + $0x58] sm:$0xff]
    %v160 = vld [vmem:[%s147 + $0x60] sm:$0xff]
    %v161 = vld [vmem:[%s147 + $0x68] sm:$0xff]
    %v162 = vld [vmem:[%s147 + $0x70] sm:$0xff]
    %v163 = vld [vmem:[%s147 + $0x78] sm:$0xff]
    %164 = vmatprep.subr.mxu0 0.0
    %165 = vmatpush1.msra.mxu0 %v163
    %166 = vmatprep.subr.mxu0 0.0
    %167 = vmatpush1.msra.mxu0 %v162
    %168 = vmatprep.subr.mxu0 0.0
    %169 = vmatpush1.msra.mxu0 %v161
    %170 = vmatprep.subr.mxu0 0.0
    %171 = vmatpush1.msra.mxu0 %v160
    %172 = vmatprep.subr.mxu0 0.0
    %173 = vmatpush1.msra.mxu0 %v159
    %174 = vmatprep.subr.mxu0 0.0
    %175 = vmatpush1.msra.mxu0 %v158
    %176 = vmatprep.subr.mxu0 0.0
    %177 = vmatpush1.msra.mxu0 %v157
    %178 = vmatprep.subr.mxu0 0.0
    %179 = vmatpush1.msra.mxu0 %v156
    %180 = vmatprep.subr.mxu0 0.0
    %181 = vmatpush1.msra.mxu0 %v155
    %182 = vmatprep.subr.mxu0 0.0
    %183 = vmatpush1.msra.mxu0 %v154
    %184 = vmatprep.subr.mxu0 0.0
    %185 = vmatpush1.msra.mxu0 %v153
    %186 = vmatprep.subr.mxu0 0.0
    %187 = vmatpush1.msra.mxu0 %v152
    %188 = vmatprep.subr.mxu0 0.0
    %189 = vmatpush1.msra.mxu0 %v151
    %190 = vmatprep.subr.mxu0 0.0
    %191 = vmatpush1.msra.mxu0 %v150
    %192 = vmatprep.subr.mxu0 0.0
    %193 = vmatpush1.msra.mxu0 %v149
    %194 = vmatprep.subr.mxu0 0.0
    %195 = vmatpush1.msra.mxu0 %v148
    %196 = vmatprep.subr.mxu0 0.0
    %197 = vmatpush2.msra.mxu0 0.0
    %198 = vmatprep.subr.mxu0 0.0
    %199 = vmatpush2.msra.mxu0 0.0
    %200 = vmatprep.subr.mxu0 0.0
    %201 = vmatpush2.msra.mxu0 0.0
    %202 = vmatprep.subr.mxu0 0.0
    %203 = vmatpush2.msra.mxu0 0.0
    %204 = vmatprep.subr.mxu0 0.0
    %205 = vmatpush2.msra.mxu0 0.0
    %206 = vmatprep.subr.mxu0 0.0
    %207 = vmatpush2.msra.mxu0 0.0
    %208 = vmatprep.subr.mxu0 0.0
    %209 = vmatpush2.msra.mxu0 0.0
    %210 = vmatprep.subr.mxu0 0.0
    %211 = vmatpush2.msra.mxu0 0.0
    %212 = vmatprep.subr.mxu0 0.0
    %213 = vmatpush2.msra.mxu0 0.0
    %214 = vmatprep.subr.mxu0 0.0
    %215 = vmatpush2.msra.mxu0 0.0
    %216 = vmatprep.subr.mxu0 0.0
    %217 = vmatpush2.msra.mxu0 0.0
    %218 = vmatprep.subr.mxu0 0.0
    %219 = vmatpush2.msra.mxu0 0.0
    %220 = vmatprep.subr.mxu0 0.0
    %221 = vmatpush2.msra.mxu0 0.0
    %222 = vmatprep.subr.mxu0 0.0
    %223 = vmatpush2.msra.mxu0 0.0
    %224 = vmatprep.subr.mxu0 0.0
    %225 = vmatpush2.msra.mxu0 0.0
    %226 = vmatprep.subr.mxu0 0.0
    %227 = vmatpush2.msra.mxu0 0.0
    %228 = vmatprep.mubr.f32.mxu0 0.0
    %229 = vmatmul.mubr.f32.gmra.mxu0 %v146
    %v230 = vpop.f32.mrf.mxu0
    %v231 = vadd.f32 0.0, %v230
    %v232 = vpop.f32.mrf.mxu0
    %233 = vdwg.mxu0
    %v234 = vrot.slane %v231, 4
    %v235 = vadd.f32 %v231, %v234
    %v236 = vrot.slane %v235, 2
    %v237 = vadd.f32 %v235, %v236
    %v238 = vrot.slane %v237, 1
    %v239 = vadd.f32 %v237, %v238
    %v240 = vmul.f32 %v239, %v122
    %v241 = vsub.f32 %v231, %v240
    %v242 = vmul.f32 %v241, %v241
    %v243 = vrot.slane %v242, 4
    %v244 = vadd.f32 %v242, %v243
    %v245 = vrot.slane %v244, 2
    %v246 = vadd.f32 %v244, %v245
    %v247 = vrot.slane %v246, 1
    %v248 = vadd.f32 %v246, %v247
    %v249 = vmul.f32 %v248, %v122
    %v250 = vadd.f32 %v249, 1e-05
    %v251 = vrsqrt.pop %v250
    %v252 = vmul.f32 %v29, %v251
    %v253 = vlaneseq
    %v254 = vshrl.u32 %v253, 7
    %v255 = vsub.s32 2, %v254
    %v256 = vrot.slane %v252, %v255
    %v257 = vmul.f32 %v241, %v256
    %v258 = vlaneseq
    %v259 = vshrl.u32 %v258, 7
    %v260 = vsub.s32 3, %v259
    %v261 = vrot.slane %v29, %v260
    %v262 = vadd.f32 %v257, %v261
    %v263 = vmax.f32 %v262, 0.0
    %s264 = scalar_lea.vmem [#allocation2], 256
    %v265 = vld [vmem:[%s264] sm:$0xff]
    %v266 = vld [vmem:[%s264 + $0x8] sm:$0xff]
    %v267 = vld [vmem:[%s264 + $0x10] sm:$0xff]
    %v268 = vld [vmem:[%s264 + $0x18] sm:$0xff]
    %v269 = vld [vmem:[%s264 + $0x20] sm:$0xff]
    %v270 = vld [vmem:[%s264 + $0x28] sm:$0xff]
    %v271 = vld [vmem:[%s264 + $0x30] sm:$0xff]
    %v272 = vld [vmem:[%s264 + $0x38] sm:$0xff]
    %v273 = vld [vmem:[%s264 + $0x40] sm:$0xff]
    %v274 = vld [vmem:[%s264 + $0x48] sm:$0xff]
    %v275 = vld [vmem:[%s264 + $0x50] sm:$0xff]
    %v276 = vld [vmem:[%s264 + $0x58] sm:$0xff]
    %v277 = vld [vmem:[%s264 + $0x60] sm:$0xff]
    %v278 = vld [vmem:[%s264 + $0x68] sm:$0xff]
    %v279 = vld [vmem:[%s264 + $0x70] sm:$0xff]
    %v280 = vld [vmem:[%s264 + $0x78] sm:$0xff]
    %281 = vmatprep.subr.mxu0 0.0
    %282 = vmatpush1.msra.mxu0 %v280
    %283 = vmatprep.subr.mxu0 0.0
    %284 = vmatpush1.msra.mxu0 %v279
    %285 = vmatprep.subr.mxu0 0.0
    %286 = vmatpush1.msra.mxu0 %v278
    %287 = vmatprep.subr.mxu0 0.0
    %288 = vmatpush1.msra.mxu0 %v277
    %289 = vmatprep.subr.mxu0 0.0
    %290 = vmatpush1.msra.mxu0 %v276
    %291 = vmatprep.subr.mxu0 0.0
    %292 = vmatpush1.msra.mxu0 %v275
    %293 = vmatprep.subr.mxu0 0.0
    %294 = vmatpush1.msra.mxu0 %v274
    %295 = vmatprep.subr.mxu0 0.0
    %296 = vmatpush1.msra.mxu0 %v273
    %297 = vmatprep.subr.mxu0 0.0
    %298 = vmatpush1.msra.mxu0 %v272
    %299 = vmatprep.subr.mxu0 0.0
    %300 = vmatpush1.msra.mxu0 %v271
    %301 = vmatprep.subr.mxu0 0.0
    %302 = vmatpush1.msra.mxu0 %v270
    %303 = vmatprep.subr.mxu0 0.0
    %304 = vmatpush1.msra.mxu0 %v269
    %305 = vmatprep.subr.mxu0 0.0
    %306 = vmatpush1.msra.mxu0 %v268
    %307 = vmatprep.subr.mxu0 0.0
    %308 = vmatpush1.msra.mxu0 %v267
    %309 = vmatprep.subr.mxu0 0.0
    %310 = vmatpush1.msra.mxu0 %v266
    %311 = vmatprep.subr.mxu0 0.0
    %312 = vmatpush1.msra.mxu0 %v265
    %313 = vmatprep.subr.mxu0 0.0
    %314 = vmatpush2.msra.mxu0 0.0
    %315 = vmatprep.subr.mxu0 0.0
    %316 = vmatpush2.msra.mxu0 0.0
    %317 = vmatprep.subr.mxu0 0.0
    %318 = vmatpush2.msra.mxu0 0.0
    %319 = vmatprep.subr.mxu0 0.0
    %320 = vmatpush2.msra.mxu0 0.0
    %321 = vmatprep.subr.mxu0 0.0
    %322 = vmatpush2.msra.mxu0 0.0
    %323 = vmatprep.subr.mxu0 0.0
    %324 = vmatpush2.msra.mxu0 0.0
    %325 = vmatprep.subr.mxu0 0.0
    %326 = vmatpush2.msra.mxu0 0.0
    %327 = vmatprep.subr.mxu0 0.0
    %328 = vmatpush2.msra.mxu0 0.0
    %329 = vmatprep.subr.mxu0 0.0
    %330 = vmatpush2.msra.mxu0 0.0
    %331 = vmatprep.subr.mxu0 0.0
    %332 = vmatpush2.msra.mxu0 0.0
    %333 = vmatprep.subr.mxu0 0.0
    %334 = vmatpush2.msra.mxu0 0.0
    %335 = vmatprep.subr.mxu0 0.0
    %336 = vmatpush2.msra.mxu0 0.0
    %337 = vmatprep.subr.mxu0 0.0
    %338 = vmatpush2.msra.mxu0 0.0
    %339 = vmatprep.subr.mxu0 0.0
    %340 = vmatpush2.msra.mxu0 0.0
    %341 = vmatprep.subr.mxu0 0.0
    %342 = vmatpush2.msra.mxu0 0.0
    %343 = vmatprep.subr.mxu0 0.0
    %344 = vmatpush2.msra.mxu0 0.0
    %345 = vmatprep.mubr.f32.mxu0 0.0
    %346 = vmatmul.mubr.f32.gmra.mxu0 %v263
    %v347 = vpop.f32.mrf.mxu0
    %v348 = vadd.f32 0.0, %v347
    %v349 = vpop.f32.mrf.mxu0
    %350 = vdwg.mxu0
    %v351 = vrot.slane %v348, 4
    %v352 = vadd.f32 %v348, %v351
    %v353 = vrot.slane %v352, 2
    %v354 = vadd.f32 %v352, %v353
    %v355 = vrot.slane %v354, 1
    %v356 = vadd.f32 %v354, %v355
    %v357 = vmul.f32 %v356, %v122
    %v358 = vsub.f32 %v348, %v357
    %v359 = vmul.f32 %v358, %v358
    %v360 = vrot.slane %v359, 4
    %v361 = vadd.f32 %v359, %v360
    %v362 = vrot.slane %v361, 2
    %v363 = vadd.f32 %v361, %v362
    %v364 = vrot.slane %v363, 1
    %v365 = vadd.f32 %v363, %v364
    %v366 = vmul.f32 %v365, %v122
    %v367 = vadd.f32 %v366, 1e-05
    %v368 = vrsqrt.pop %v367
    %v369 = vmul.f32 %v29, %v368
    %v370 = vlaneseq
    %v371 = vshrl.u32 %v370, 7
    %v372 = vsub.s32 4, %v371
    %v373 = vrot.slane %v369, %v372
    %v374 = vmul.f32 %v358, %v373
    %v375 = vlaneseq
    %v376 = vshrl.u32 %v375, 7
    %v377 = vsub.s32 5, %v376
    %v378 = vrot.slane %v29, %v377
    %v379 = vadd.f32 %v374, %v378
    %v380 = vmax.f32 %v379, 0.0
    %s381 = scalar_lea.vmem [#allocation2], 384
    %v382 = vld [vmem:[%s381] sm:$0xff]
    %v383 = vld [vmem:[%s381 + $0x8] sm:$0xff]
    %v384 = vld [vmem:[%s381 + $0x10] sm:$0xff]
    %v385 = vld [vmem:[%s381 + $0x18] sm:$0xff]
    %v386 = vld [vmem:[%s381 + $0x20] sm:$0xff]
    %v387 = vld [vmem:[%s381 + $0x28] sm:$0xff]
    %v388 = vld [vmem:[%s381 + $0x30] sm:$0xff]
    %v389 = vld [vmem:[%s381 + $0x38] sm:$0xff]
    %v390 = vld [vmem:[%s381 + $0x40] sm:$0xff]
    %v391 = vld [vmem:[%s381 + $0x48] sm:$0xff]
    %v392 = vld [vmem:[%s381 + $0x50] sm:$0xff]
    %v393 = vld [vmem:[%s381 + $0x58] sm:$0xff]
    %v394 = vld [vmem:[%s381 + $0x60] sm:$0xff]
    %v395 = vld [vmem:[%s381 + $0x68] sm:$0xff]
    %v396 = vld [vmem:[%s381 + $0x70] sm:$0xff]
    %v397 = vld [vmem:[%s381 + $0x78] sm:$0xff]
    %v398 = vlaneseq
    %v399 = vshrl.u32 %v398, 7
    %v400 = vsub.s32 6, %v399
    %v401 = vrot.slane %v29, %v400
    %402 = vmatprep.subr.mxu0 0.0
    %403 = vmatpush1.msra.mxu0 %v397
    %404 = vmatprep.subr.mxu0 0.0
    %405 = vmatpush1.msra.mxu0 %v396
    %406 = vmatprep.subr.mxu0 0.0
    %407 = vmatpush1.msra.mxu0 %v395
    %408 = vmatprep.subr.mxu0 0.0
    %409 = vmatpush1.msra.mxu0 %v394
    %410 = vmatprep.subr.mxu0 0.0
    %411 = vmatpush1.msra.mxu0 %v393
    %412 = vmatprep.subr.mxu0 0.0
    %413 = vmatpush1.msra.mxu0 %v392
    %414 = vmatprep.subr.mxu0 0.0
    %415 = vmatpush1.msra.mxu0 %v391
    %416 = vmatprep.subr.mxu0 0.0
    %417 = vmatpush1.msra.mxu0 %v390
    %418 = vmatprep.subr.mxu0 0.0
    %419 = vmatpush1.msra.mxu0 %v389
    %420 = vmatprep.subr.mxu0 0.0
    %421 = vmatpush1.msra.mxu0 %v388
    %422 = vmatprep.subr.mxu0 0.0
    %423 = vmatpush1.msra.mxu0 %v387
    %424 = vmatprep.subr.mxu0 0.0
    %425 = vmatpush1.msra.mxu0 %v386
    %426 = vmatprep.subr.mxu0 0.0
    %427 = vmatpush1.msra.mxu0 %v385
    %428 = vmatprep.subr.mxu0 0.0
    %429 = vmatpush1.msra.mxu0 %v384
    %430 = vmatprep.subr.mxu0 0.0
    %431 = vmatpush1.msra.mxu0 %v383
    %432 = vmatprep.subr.mxu0 0.0
    %433 = vmatpush1.msra.mxu0 %v382
    %434 = vmatprep.subr.mxu0 0.0
    %435 = vmatpush2.msra.mxu0 0.0
    %436 = vmatprep.subr.mxu0 0.0
    %437 = vmatpush2.msra.mxu0 0.0
    %438 = vmatprep.subr.mxu0 0.0
    %439 = vmatpush2.msra.mxu0 0.0
    %440 = vmatprep.subr.mxu0 0.0
    %441 = vmatpush2.msra.mxu0 0.0
    %442 = vmatprep.subr.mxu0 0.0
    %443 = vmatpush2.msra.mxu0 0.0
    %444 = vmatprep.subr.mxu0 0.0
    %445 = vmatpush2.msra.mxu0 0.0
    %446 = vmatprep.subr.mxu0 0.0
    %447 = vmatpush2.msra.mxu0 0.0
    %448 = vmatprep.subr.mxu0 0.0
    %449 = vmatpush2.msra.mxu0 0.0
    %450 = vmatprep.subr.mxu0 0.0
    %451 = vmatpush2.msra.mxu0 0.0
    %452 = vmatprep.subr.mxu0 0.0
    %453 = vmatpush2.msra.mxu0 0.0
    %454 = vmatprep.subr.mxu0 0.0
    %455 = vmatpush2.msra.mxu0 0.0
    %456 = vmatprep.subr.mxu0 0.0
    %457 = vmatpush2.msra.mxu0 0.0
    %458 = vmatprep.subr.mxu0 0.0
    %459 = vmatpush2.msra.mxu0 0.0
    %460 = vmatprep.subr.mxu0 0.0
    %461 = vmatpush2.msra.mxu0 0.0
    %462 = vmatprep.subr.mxu0 0.0
    %463 = vmatpush2.msra.mxu0 0.0
    %464 = vmatprep.subr.mxu0 0.0
    %465 = vmatpush2.msra.mxu0 0.0
    %466 = vmatprep.mubr.f32.mxu0 0.0
    %467 = vmatmul.mubr.f32.gmra.mxu0 %v380
    %v468 = vpop.f32.mrf.mxu0
    %v469 = vadd.f32 %v401, %v468
    %v470 = vpop.f32.mrf.mxu0
    %471 = vdwg.mxu0
    %472 = vst [vmem:[%s3] sm:$0xff] %v469
    // Predicated region
    $region18: #{mlp_forward.1} parent=1 // pred_check
      _
    $region19: #{mlp_forward.1} parent=1 // pred_check_branch
      %474 = sbr.rel (0) target = $region21
    $region20: #{mlp_forward.1} parent=1 // pred_region
      _
    $region21: #{mlp_forward.1} parent=1 // pred_fallthru
      _
    // Predicated region
    $region22: #{mlp_forward.1} parent=1 // pred_check
      _
    $region23: #{mlp_forward.1} parent=1 // pred_check_branch
      %476 = sbr.rel (0) target = $region25
    $region24: #{mlp_forward.1} parent=1 // pred_region
      _
    $region25: #{mlp_forward.1} parent=1 // pred_fallthru
      _
    %477 = vsyncpa [#allocation3], 1

</llo_original>
